<compile_context>
chip_gen: v6e
topology: v6e:2x2x1
jax: 0.10.0
libtpu: 0.0.40
codegen_flags: <defaults>
</compile_context>

<pallas_src>
import functools

import jax
import jax.numpy as jnp
from jax import lax
from jax.experimental import pallas as pl
from jax.experimental.pallas import tpu as pltpu

MODEL_DIM = 64   # matches `model_dim = 64` in the PyTorch module
DROPOUT_P = 0.2  # unused at inference (eval-mode dropout == identity)


def _head_kernel(lhs_ref, w_ref, out_ref, attn_ref, *, B, T, H):
    """Single-invocation disentangled-attention head.

    lhs_ref : (B*T + T, 2C)  block-diagonal [[content, 0], [0, position]]
    w_ref   : (2C, 3H)       stacked [[w_qc*s | w_kc | w_v], [w_qp*s | w_kp | 0]]
    out_ref : (B*T, H)
    attn_ref: (B*T, T)
    """
    cdt = lhs_ref.dtype
    BT = B * T

    # ---- One merged projection (K = 2C = 128 fills the MXU), f32 accumulation. ----
    proj = jnp.dot(lhs_ref[...], w_ref[...],
                   preferred_element_type=jnp.float32)            # (BT+T, 3H) f32

    # Content rows -> [q_c | k_c | v]; position rows -> [q_p | k_p | 0].
    # Lane-offset slices are left as-is: cheap XLU selects (per review).
    qkv = proj[:BT]                                               # (BT, 3H)
    pqk = proj[BT:]                                               # (T,  3H)
    # Cast to compute dtype so stage-2 matmuls are single bf16 MXU passes (f32 acc).
    # (BT, H) -> (B, T, H) only splits the sublane axis (T == 8): layout no-op.
    q_c = qkv[:, 0 * H:1 * H].astype(cdt).reshape(B, T, H)        # 1/sqrt(H) pre-folded
    k_c = qkv[:, 1 * H:2 * H].astype(cdt).reshape(B, T, H)
    v   = qkv[:, 2 * H:3 * H].astype(cdt).reshape(B, T, H)
    q_p = pqk[:, 0 * H:1 * H].astype(cdt)
    k_p = pqk[:, 1 * H:2 * H].astype(cdt)

    # ---- Disentangled logits: content-content + (batch-invariant) position-position.
    cc = lax.dot_general(q_c, k_c,
                         dimension_numbers=(((2,), (2,)), ((0,), (0,))),
                         preferred_element_type=jnp.float32)      # (B, T, T)
    pp = lax.dot_general(q_p, k_p,
                         dimension_numbers=(((1,), (1,)), ((), ())),
                         preferred_element_type=jnp.float32)      # (T, T), computed once
    logits = cc + pp[None, :, :]

    # ---- Numerically stable softmax in f32, exact normalization (denom = B*T values).
    m = jnp.max(logits, axis=-1, keepdims=True)
    e = jnp.exp(logits - m)
    inv = 1.0 / jnp.sum(e, axis=-1, keepdims=True)
    attn = e * inv                                                # (B, T, T)

    # TODO(synk): training-mode dropout on `attn` not implemented (eval identity).
    out = lax.dot_general(attn.astype(cdt), v,
                          dimension_numbers=(((2,), (1,)), ((0,), (0,))),
                          preferred_element_type=jnp.float32)     # (B, T, H)

    out_ref[...] = out.reshape(BT, H).astype(out_ref.dtype)
    attn_ref[...] = attn.reshape(BT, T).astype(attn_ref.dtype)


def pack_disentangled_weights(w_qc, w_kc, w_v, w_qp, w_kp,
                              *, compute_dtype=jnp.bfloat16):
    """One-time weight pack (do at init, NOT per call).

    Folds the 1/sqrt(H) attention scale into the query weights and stacks everything
    into a single (2C, 3H) projection matrix:
        [[ w_qc*s | w_kc | w_v ],
         [ w_qp*s | w_kp |  0  ]]
    """
    C, H = w_qc.shape
    scale = float(H) ** -0.5
    w_content = jnp.concatenate([w_qc * scale, w_kc, w_v], axis=1)           # (C, 3H)
    w_position = jnp.concatenate(
        [w_qp * scale, w_kp, jnp.zeros((C, H), w_qp.dtype)], axis=1)         # (C, 3H)
    return jnp.concatenate([w_content, w_position], axis=0).astype(compute_dtype)


def disentangled_head(content, position, w_packed, *, out_dtype=None):
    """content: (B,T,C), position: (T,C), w_packed: (2C,3H) from pack_disentangled_weights."""
    B, T, C = content.shape
    assert C == MODEL_DIM and position.shape == (T, C)
    assert w_packed.shape[0] == 2 * C
    H = w_packed.shape[1] // 3
    compute_dtype = w_packed.dtype
    if out_dtype is None:
        out_dtype = compute_dtype
    BT = B * T

    # Wrapper-side layout plumbing: flatten content and build the block-diagonal LHS
    # so the kernel does a single (BT+T, 2C) @ (2C, 3H) projection.
    x = content.reshape(BT, C).astype(compute_dtype)
    p = position.astype(compute_dtype)
    lhs = jnp.concatenate([
        jnp.concatenate([x, jnp.zeros((BT, C), compute_dtype)], axis=1),
        jnp.concatenate([jnp.zeros((T, C), compute_dtype), p], axis=1),
    ], axis=0)                                                               # (BT+T, 2C)

    # Single gridless invocation: every operand is a few KiB, so the whole problem
    # lives in VMEM and per-step pipeline/DMA-setup overhead of a grid is avoided.
    # TODO(synk): for production T, re-grid flash-style over (B, T//tq) with an online
    # softmax so (T, T) logits never materialize; mark those axes "parallel" via
    # pltpu.CompilerParams(dimension_semantics=...) so v7x's 2nd TensorCore is used,
    # and size tiles against v7x's 64 MiB VMEM (set vmem_limit_bytes explicitly).
    out2d, attn2d = pl.pallas_call(
        functools.partial(_head_kernel, B=B, T=T, H=H),
        out_shape=(
            jax.ShapeDtypeStruct((BT, H), out_dtype),
            jax.ShapeDtypeStruct((BT, T), out_dtype),
        ),
        in_specs=[pl.BlockSpec(memory_space=pltpu.MemorySpace.VMEM),
                  pl.BlockSpec(memory_space=pltpu.MemorySpace.VMEM)],
        out_specs=(pl.BlockSpec(memory_space=pltpu.MemorySpace.VMEM),
                   pl.BlockSpec(memory_space=pltpu.MemorySpace.VMEM)),
    )(lhs, w_packed)

    return out2d.reshape(B, T, H), attn2d.reshape(B, T, T)


def _reference(content, position, w_qc, w_kc, w_v, w_qp, w_kp):
    H = w_qc.shape[1]
    scale = H ** -0.5
    q_c = content @ w_qc
    k_c = content @ w_kc
    q_p = position @ w_qp
    k_p = position @ w_kp
    cc = jnp.einsum("bth,bsh->bts", q_c, k_c) * scale
    pp = (q_p @ k_p.T) * scale
    attn = jax.nn.softmax(cc + pp[None], axis=-1)
    v = content @ w_v
    return attn @ v, attn


if __name__ == "__main__":
    B, T, C = 2, 8, MODEL_DIM
    HEAD_SIZE = 16

    key = jax.random.PRNGKey(0)
    k_c_in, k_p_in, k1, k2, k3, k4, k5 = jax.random.split(key, 7)

    content = jax.random.normal(k_c_in, (B, T, C), dtype=jnp.float32)
    position = jax.random.normal(k_p_in, (T, C), dtype=jnp.float32)

    # Deterministic nn.Linear-style init (uniform in +-1/sqrt(fan_in)), stored as (C, H).
    bound = 1.0 / (C ** 0.5)
    init = lambda k: jax.random.uniform(k, (C, HEAD_SIZE), jnp.float32, -bound, bound)
    w_qc, w_kc, w_v, w_qp, w_kp = init(k1), init(k2), init(k3), init(k4), init(k5)

    ref_out, ref_attn = _reference(content, position, w_qc, w_kc, w_v, w_qp, w_kp)

    # --- strict correctness check: full f32 compute path, exact softmax --------------
    w_packed_f32 = pack_disentangled_weights(w_qc, w_kc, w_v, w_qp, w_kp,
                                             compute_dtype=jnp.float32)
    out32, attn32 = disentangled_head(content, position, w_packed_f32,
                                      out_dtype=jnp.float32)
    jax.block_until_ready((out32, attn32))
    assert jnp.allclose(out32, ref_out, atol=1e-3, rtol=1e-3)
    assert jnp.allclose(attn32, ref_attn, atol=1e-3, rtol=1e-3)

    # --- performance-default path: bf16 operands, f32 accumulation, bf16 outputs -----
    w_packed = pack_disentangled_weights(w_qc, w_kc, w_v, w_qp, w_kp)   # packed once
    out, attn_weights = disentangled_head(content, position, w_packed)
    jax.block_until_ready((out, attn_weights))

    q = lambda a: a.astype(jnp.bfloat16).astype(jnp.float32)  # match bf16 quantization
    ref_out_b, ref_attn_b = _reference(q(content), q(position), q(w_qc), q(w_kc),
                                       q(w_v), q(w_qp), q(w_kp))
    assert jnp.allclose(out.astype(jnp.float32), ref_out_b, atol=3e-2, rtol=3e-2)
    assert jnp.allclose(attn_weights.astype(jnp.float32), ref_attn_b, atol=3e-2, rtol=3e-2)

    assert out.shape == (B, T, HEAD_SIZE)
    assert attn_weights.shape == (B, T, T)

    print("KERNEL_OK")
</pallas_src>

<mosaic_0001>
module attributes {stable_mosaic.version = 11 : i64} {
  func.func @_head_kernel(%arg0: memref<24x128xf32, #tpu.memory_space<vmem>>, %arg1: memref<128x48xf32, #tpu.memory_space<vmem>>, %arg2: memref<16x16xf32, #tpu.memory_space<vmem>>, %arg3: memref<16x8xf32, #tpu.memory_space<vmem>>) attributes {dimension_semantics = [], scalar_prefetch = 0 : i64, scratch_operands = 0 : i64, tpu.core_type = #tpu.core_type<tc>} {
    %c0 = arith.constant 0 : index
    %c0_0 = arith.constant 0 : index
    %0 = vector.load %arg0[%c0, %c0_0] : memref<24x128xf32, #tpu.memory_space<vmem>>, vector<24x128xf32>
    %c0_1 = arith.constant 0 : index
    %c0_2 = arith.constant 0 : index
    %1 = vector.load %arg1[%c0_1, %c0_2] : memref<128x48xf32, #tpu.memory_space<vmem>>, vector<128x48xf32>
    %cst = arith.constant dense<0.000000e+00> : vector<24x48xf32>
    %2 = tpu.matmul %0, %1, %cst {dimension_numbers = #tpu.dot_dimension_numbers<[1], [0], [0], [1], [0, 0, 1, 1], [], []>} : vector<24x128xf32>, vector<128x48xf32>, vector<24x48xf32> -> vector<24x48xf32>
    %3 = vector.extract_strided_slice %2 {offsets = [0, 0], sizes = [16, 48], strides = [1, 1]} : vector<24x48xf32> to vector<16x48xf32>
    %4 = vector.extract_strided_slice %2 {offsets = [16, 0], sizes = [8, 48], strides = [1, 1]} : vector<24x48xf32> to vector<8x48xf32>
    %5 = vector.extract_strided_slice %3 {offsets = [0, 0], sizes = [16, 16], strides = [1, 1]} : vector<16x48xf32> to vector<16x16xf32>
    %6 = vector.shape_cast %5 : vector<16x16xf32> to vector<2x8x16xf32>
    %7 = vector.extract_strided_slice %3 {offsets = [0, 16], sizes = [16, 16], strides = [1, 1]} : vector<16x48xf32> to vector<16x16xf32>
    %8 = vector.shape_cast %7 : vector<16x16xf32> to vector<2x8x16xf32>
    %9 = vector.extract_strided_slice %3 {offsets = [0, 32], sizes = [16, 16], strides = [1, 1]} : vector<16x48xf32> to vector<16x16xf32>
    %10 = vector.shape_cast %9 : vector<16x16xf32> to vector<2x8x16xf32>
    %11 = vector.extract_strided_slice %4 {offsets = [0, 0], sizes = [8, 16], strides = [1, 1]} : vector<8x48xf32> to vector<8x16xf32>
    %12 = vector.extract_strided_slice %4 {offsets = [0, 16], sizes = [8, 16], strides = [1, 1]} : vector<8x48xf32> to vector<8x16xf32>
    %cst_3 = arith.constant dense<0.000000e+00> : vector<2x8x8xf32>
    %13 = tpu.matmul %6, %8, %cst_3 {dimension_numbers = #tpu.dot_dimension_numbers<[2], [2], [1], [1], [0, 0, 0, 1, 1, 1], [0], [0]>} : vector<2x8x16xf32>, vector<2x8x16xf32>, vector<2x8x8xf32> -> vector<2x8x8xf32>
    %cst_4 = arith.constant dense<0.000000e+00> : vector<8x8xf32>
    %14 = tpu.matmul %11, %12, %cst_4 {dimension_numbers = #tpu.dot_dimension_numbers<[1], [1], [0], [0], [0, 0, 1, 0], [], []>} : vector<8x16xf32>, vector<8x16xf32>, vector<8x8xf32> -> vector<8x8xf32>
    %15 = vector.shape_cast %14 : vector<8x8xf32> to vector<1x8x8xf32>
    %16 = vector.broadcast %15 : vector<1x8x8xf32> to vector<2x8x8xf32>
    %17 = arith.addf %13, %16 : vector<2x8x8xf32>
    %cst_5 = arith.constant dense<0xFF800000> : vector<2x8xf32>
    %18 = vector.multi_reduction <maximumf>, %17, %cst_5 [2] : vector<2x8x8xf32> to vector<2x8xf32>
    %19 = vector.shape_cast %18 : vector<2x8xf32> to vector<2x8x1xf32>
    %20 = vector.broadcast %19 : vector<2x8x1xf32> to vector<2x8x8xf32>
    %21 = arith.subf %17, %20 : vector<2x8x8xf32>
    %22 = math.exp %21 : vector<2x8x8xf32>
    %cst_6 = arith.constant dense<0.000000e+00> : vector<2x8xf32>
    %23 = vector.multi_reduction <add>, %22, %cst_6 [2] : vector<2x8x8xf32> to vector<2x8xf32>
    %24 = vector.shape_cast %23 : vector<2x8xf32> to vector<2x8x1xf32>
    %cst_7 = arith.constant 1.000000e+00 : f32
    %25 = vector.broadcast %cst_7 : f32 to vector<2x8x1xf32>
    %26 = arith.divf %25, %24 : vector<2x8x1xf32>
    %27 = vector.broadcast %26 : vector<2x8x1xf32> to vector<2x8x8xf32>
    %28 = arith.mulf %22, %27 : vector<2x8x8xf32>
    %cst_8 = arith.constant dense<0.000000e+00> : vector<2x8x16xf32>
    %29 = tpu.matmul %28, %10, %cst_8 {dimension_numbers = #tpu.dot_dimension_numbers<[2], [1], [1], [2], [0, 0, 0, 1, 1, 2], [0], [0]>} : vector<2x8x8xf32>, vector<2x8x16xf32>, vector<2x8x16xf32> -> vector<2x8x16xf32>
    %30 = vector.shape_cast %29 : vector<2x8x16xf32> to vector<16x16xf32>
    %c0_9 = arith.constant 0 : index
    %c0_10 = arith.constant 0 : index
    %31 = vector.load %arg2[%c0_9, %c0_10] : memref<16x16xf32, #tpu.memory_space<vmem>>, vector<16x16xf32>
    tpu.vector_store %arg2[%c0_9, %c0_10], %30 {strides = array<i32>} : memref<16x16xf32, #tpu.memory_space<vmem>>, vector<16x16xf32>,
    %32 = vector.shape_cast %28 : vector<2x8x8xf32> to vector<16x8xf32>
    %c0_11 = arith.constant 0 : index
    %c0_12 = arith.constant 0 : index
    %33 = vector.load %arg3[%c0_11, %c0_12] : memref<16x8xf32, #tpu.memory_space<vmem>>, vector<16x8xf32>
    tpu.vector_store %arg3[%c0_11, %c0_12], %32 {strides = array<i32>} : memref<16x8xf32, #tpu.memory_space<vmem>>, vector<16x8xf32>,
    return
  }
}

</mosaic_0001>

<llo_original>
// kernel: tpu_custom_call.1
$region0: #{tpu_custom_call.1}
  #allocation0 [shape = 'u32[]', space=smem, size = 0x4, offset = 0x4, fixed_abs, tag = 'smem constant byte address 0x4 - core index']
  #allocation1 [shape = 'u32[144,128]{1,0:T(1,128)}', space=vmem, size = 0x12000, scoped, tag = 'internal scratch']
  %s0 = inlined_call_operand.vmem [shape: f32[24,128], index: 0, kind: input, shape index: {}]
  %s1 = inlined_call_operand.vmem [shape: f32[128,48], index: 1, kind: input, shape index: {}]
  %s2 = inlined_call_operand.hbm [shape: f32[16,16], index: 2, kind: output, shape index: {0}]
  %s3 = inlined_call_operand.vmem [shape: f32[16,8], index: 3, kind: output, shape index: {1}]
  %4 = xla_tuple %s2, %s3
  %s5 = sld [smem:[#allocation0]]
  $region26: #{tpu_custom_call.1} parent=0
    _
  %s7 = ssub.s32 1, %s5
  %s8 = scalar_select 0, %s7, %s5
  $region1: #{tpu_custom_call.1} parent=0
    #allocation2 [shape = 'u8[8192]{0}', space=vmem, size = 0x2000, scoped, tag = 'output window, operand 0, single buffered']
    #allocation3 [shape = 's32[1]{0}', space=sflag, size = 0x4, scoped, tag = 'scoped memory for tpu_custom_call.1']
    %9 = vsyncpa [#allocation3], 0
    // Predicated region
    $region2: #{tpu_custom_call.1} parent=1 // pred_check
      _
    $region3: #{tpu_custom_call.1} parent=1 // pred_check_branch
      %11 = sbr.rel (0) target = $region5
    $region4: #{tpu_custom_call.1} parent=1 // pred_region
      _
    $region5: #{tpu_custom_call.1} parent=1 // pred_fallthru
      _
    // Predicated region
    $region6: #{tpu_custom_call.1} parent=1 // pred_check
      _
    $region7: #{tpu_custom_call.1} parent=1 // pred_check_branch
      %13 = sbr.rel (0) target = $region9
    $region8: #{tpu_custom_call.1} parent=1 // pred_region
      _
    $region9: #{tpu_custom_call.1} parent=1 // pred_fallthru
      _
    %v14 = vld [vmem:[%s0] sm:$0xff]
    %v15 = vld [vmem:[%s0 + $0x8] sm:$0xff]
    %v16 = vld [vmem:[%s0 + $0x10] sm:$0xff]
    %v17 = vld [vmem:[%s1] sm:$0xff]
    %v18 = vld [vmem:[%s1 + $0x8] sm:$0xff]
    %v19 = vld [vmem:[%s1 + $0x10] sm:$0xff]
    %v20 = vld [vmem:[%s1 + $0x18] sm:$0xff]
    %v21 = vld [vmem:[%s1 + $0x20] sm:$0xff]
    %v22 = vld [vmem:[%s1 + $0x28] sm:$0xff]
    %v23 = vld [vmem:[%s1 + $0x30] sm:$0xff]
    %v24 = vld [vmem:[%s1 + $0x38] sm:$0xff]
    %v25 = vld [vmem:[%s1 + $0x40] sm:$0xff]
    %v26 = vld [vmem:[%s1 + $0x48] sm:$0xff]
    %v27 = vld [vmem:[%s1 + $0x50] sm:$0xff]
    %v28 = vld [vmem:[%s1 + $0x58] sm:$0xff]
    %v29 = vld [vmem:[%s1 + $0x60] sm:$0xff]
    %v30 = vld [vmem:[%s1 + $0x68] sm:$0xff]
    %v31 = vld [vmem:[%s1 + $0x70] sm:$0xff]
    %v32 = vld [vmem:[%s1 + $0x78] sm:$0xff]
    %33 = vmatprep.subr.mxu0 0.0
    %34 = vmatpush1.msra.mxu0 %v32
    %35 = vmatprep.subr.mxu0 0.0
    %36 = vmatpush1.msra.mxu0 %v31
    %37 = vmatprep.subr.mxu0 0.0
    %38 = vmatpush1.msra.mxu0 %v30
    %39 = vmatprep.subr.mxu0 0.0
    %40 = vmatpush1.msra.mxu0 %v29
    %41 = vmatprep.subr.mxu0 0.0
    %42 = vmatpush1.msra.mxu0 %v28
    %43 = vmatprep.subr.mxu0 0.0
    %44 = vmatpush1.msra.mxu0 %v27
    %45 = vmatprep.subr.mxu0 0.0
    %46 = vmatpush1.msra.mxu0 %v26
    %47 = vmatprep.subr.mxu0 0.0
    %48 = vmatpush1.msra.mxu0 %v25
    %49 = vmatprep.subr.mxu0 0.0
    %50 = vmatpush1.msra.mxu0 %v24
    %51 = vmatprep.subr.mxu0 0.0
    %52 = vmatpush1.msra.mxu0 %v23
    %53 = vmatprep.subr.mxu0 0.0
    %54 = vmatpush1.msra.mxu0 %v22
    %55 = vmatprep.subr.mxu0 0.0
    %56 = vmatpush1.msra.mxu0 %v21
    %57 = vmatprep.subr.mxu0 0.0
    %58 = vmatpush1.msra.mxu0 %v20
    %59 = vmatprep.subr.mxu0 0.0
    %60 = vmatpush1.msra.mxu0 %v19
    %61 = vmatprep.subr.mxu0 0.0
    %62 = vmatpush1.msra.mxu0 %v18
    %63 = vmatprep.subr.mxu0 0.0
    %64 = vmatpush1.msra.mxu0 %v17
    %65 = vmatprep.subr.mxu0 0.0
    %66 = vmatpush2.msra.mxu0 0.0
    %67 = vmatprep.subr.mxu0 0.0
    %68 = vmatpush2.msra.mxu0 0.0
    %69 = vmatprep.subr.mxu0 0.0
    %70 = vmatpush2.msra.mxu0 0.0
    %71 = vmatprep.subr.mxu0 0.0
    %72 = vmatpush2.msra.mxu0 0.0
    %73 = vmatprep.subr.mxu0 0.0
    %74 = vmatpush2.msra.mxu0 0.0
    %75 = vmatprep.subr.mxu0 0.0
    %76 = vmatpush2.msra.mxu0 0.0
    %77 = vmatprep.subr.mxu0 0.0
    %78 = vmatpush2.msra.mxu0 0.0
    %79 = vmatprep.subr.mxu0 0.0
    %80 = vmatpush2.msra.mxu0 0.0
    %81 = vmatprep.subr.mxu0 0.0
    %82 = vmatpush2.msra.mxu0 0.0
    %83 = vmatprep.subr.mxu0 0.0
    %84 = vmatpush2.msra.mxu0 0.0
    %85 = vmatprep.subr.mxu0 0.0
    %86 = vmatpush2.msra.mxu0 0.0
    %87 = vmatprep.subr.mxu0 0.0
    %88 = vmatpush2.msra.mxu0 0.0
    %89 = vmatprep.subr.mxu0 0.0
    %90 = vmatpush2.msra.mxu0 0.0
    %91 = vmatprep.subr.mxu0 0.0
    %92 = vmatpush2.msra.mxu0 0.0
    %93 = vmatprep.subr.mxu0 0.0
    %94 = vmatpush2.msra.mxu0 0.0
    %95 = vmatprep.subr.mxu0 0.0
    %96 = vmatpush2.msra.mxu0 0.0
    %97 = vmatprep.mubr.f32.mxu0 0.0
    %98 = vmatmul.mubr.f32.gmra.mxu0 %v14
    %v99 = vpop.f32.mrf.mxu0
    %v100 = vadd.f32 0.0, %v99
    %v101 = vpop.f32.mrf.mxu0
    %102 = vmatprep.mubr.f32.mxu0 0.0
    %103 = vmatmul.mubr.f32.gmra.mxu0 %v15
    %v104 = vpop.f32.mrf.mxu0
    %v105 = vadd.f32 0.0, %v104
    %v106 = vpop.f32.mrf.mxu0
    %107 = vmatprep.mubr.f32.mxu0 0.0
    %108 = vmatmul.mubr.f32.gmra.mxu0 %v16
    %v109 = vpop.f32.mrf.mxu0
    %v110 = vadd.f32 0.0, %v109
    %v111 = vpop.f32.mrf.mxu0
    %112 = vdwg.mxu0
    %114 = vrot.lane.b32.xlu0 %v110, 112
    %v115 = vpop.permute.xlu0 %114
    %vm116 = vcmask 130048
    %v117 = vsel %vm116, %v110, 0
    %v119 = vsel %vm116, %v115, 0
    %121 = vmatprep.subr.mxu0 0.0
    %122 = vmatpush1.xpose.msra.mxu0 0.0
    %123 = vmatprep.subr.mxu0 0.0
    %124 = vmatpush1.xpose.msra.mxu0 0.0
    %125 = vmatprep.subr.mxu0 0.0
    %126 = vmatpush1.xpose.msra.mxu0 0.0
    %127 = vmatprep.subr.mxu0 0.0
    %128 = vmatpush1.xpose.msra.mxu0 0.0
    %129 = vmatprep.subr.mxu0 0.0
    %130 = vmatpush1.xpose.msra.mxu0 0.0
    %131 = vmatprep.subr.mxu0 0.0
    %132 = vmatpush1.xpose.msra.mxu0 0.0
    %133 = vmatprep.subr.mxu0 0.0
    %134 = vmatpush1.xpose.msra.mxu0 0.0
    %135 = vmatprep.subr.mxu0 0.0
    %136 = vmatpush1.xpose.msra.mxu0 0.0
    %137 = vmatprep.subr.mxu0 0.0
    %138 = vmatpush1.xpose.msra.mxu0 0.0
    %139 = vmatprep.subr.mxu0 0.0
    %140 = vmatpush1.xpose.msra.mxu0 0.0
    %141 = vmatprep.subr.mxu0 0.0
    %142 = vmatpush1.xpose.msra.mxu0 0.0
    %143 = vmatprep.subr.mxu0 0.0
    %144 = vmatpush1.xpose.msra.mxu0 0.0
    %145 = vmatprep.subr.mxu0 0.0
    %146 = vmatpush1.xpose.msra.mxu0 0.0
    %147 = vmatprep.subr.mxu0 0.0
    %148 = vmatpush1.xpose.msra.mxu0 0.0
    %149 = vmatprep.subr.mxu0 0.0
    %150 = vmatpush1.xpose.msra.mxu0 0.0
    %151 = vmatprep.subr.mxu0 0.0
    %152 = vmatpush1.xpose.msra.mxu0 %v119
    %153 = vmatprep.subr.mxu0 0.0
    %154 = vmatpush2.xpose.msra.mxu0 0.0
    %155 = vmatprep.subr.mxu0 0.0
    %156 = vmatpush2.xpose.msra.mxu0 0.0
    %157 = vmatprep.subr.mxu0 0.0
    %158 = vmatpush2.xpose.msra.mxu0 0.0
    %159 = vmatprep.subr.mxu0 0.0
    %160 = vmatpush2.xpose.msra.mxu0 0.0
    %161 = vmatprep.subr.mxu0 0.0
    %162 = vmatpush2.xpose.msra.mxu0 0.0
    %163 = vmatprep.subr.mxu0 0.0
    %164 = vmatpush2.xpose.msra.mxu0 0.0
    %165 = vmatprep.subr.mxu0 0.0
    %166 = vmatpush2.xpose.msra.mxu0 0.0
    %167 = vmatprep.subr.mxu0 0.0
    %168 = vmatpush2.xpose.msra.mxu0 0.0
    %169 = vmatprep.subr.mxu0 0.0
    %170 = vmatpush2.xpose.msra.mxu0 0.0
    %171 = vmatprep.subr.mxu0 0.0
    %172 = vmatpush2.xpose.msra.mxu0 0.0
    %173 = vmatprep.subr.mxu0 0.0
    %174 = vmatpush2.xpose.msra.mxu0 0.0
    %175 = vmatprep.subr.mxu0 0.0
    %176 = vmatpush2.xpose.msra.mxu0 0.0
    %177 = vmatprep.subr.mxu0 0.0
    %178 = vmatpush2.xpose.msra.mxu0 0.0
    %179 = vmatprep.subr.mxu0 0.0
    %180 = vmatpush2.xpose.msra.mxu0 0.0
    %181 = vmatprep.subr.mxu0 0.0
    %182 = vmatpush2.xpose.msra.mxu0 0.0
    %183 = vmatprep.subr.mxu0 0.0
    %184 = vmatpush2.xpose.msra.mxu0 0.0
    %185 = vmatprep.mubr.f32.mxu0 0.0
    %186 = vmatmul.mubr.f32.gmra.mxu0 %v117
    %v187 = vpop.f32.mrf.mxu0
    %v188 = vadd.f32 0.0, %v187
    %v189 = vpop.f32.mrf.mxu0
    %190 = vdwg.mxu0
    %192 = vrot.lane.b32.xlu0 %v100, 112
    %v193 = vpop.permute.xlu0 %192
    %v194 = vsel %vm116, %v100, 0
    %v196 = vsel %vm116, %v193, 0
    %198 = vmatprep.subr.mxu0 0.0
    %199 = vmatpush1.xpose.msra.mxu0 0.0
    %200 = vmatprep.subr.mxu0 0.0
    %201 = vmatpush1.xpose.msra.mxu0 0.0
    %202 = vmatprep.subr.mxu0 0.0
    %203 = vmatpush1.xpose.msra.mxu0 0.0
    %204 = vmatprep.subr.mxu0 0.0
    %205 = vmatpush1.xpose.msra.mxu0 0.0
    %206 = vmatprep.subr.mxu0 0.0
    %207 = vmatpush1.xpose.msra.mxu0 0.0
    %208 = vmatprep.subr.mxu0 0.0
    %209 = vmatpush1.xpose.msra.mxu0 0.0
    %210 = vmatprep.subr.mxu0 0.0
    %211 = vmatpush1.xpose.msra.mxu0 0.0
    %212 = vmatprep.subr.mxu0 0.0
    %213 = vmatpush1.xpose.msra.mxu0 0.0
    %214 = vmatprep.subr.mxu0 0.0
    %215 = vmatpush1.xpose.msra.mxu0 0.0
    %216 = vmatprep.subr.mxu0 0.0
    %217 = vmatpush1.xpose.msra.mxu0 0.0
    %218 = vmatprep.subr.mxu0 0.0
    %219 = vmatpush1.xpose.msra.mxu0 0.0
    %220 = vmatprep.subr.mxu0 0.0
    %221 = vmatpush1.xpose.msra.mxu0 0.0
    %222 = vmatprep.subr.mxu0 0.0
    %223 = vmatpush1.xpose.msra.mxu0 0.0
    %224 = vmatprep.subr.mxu0 0.0
    %225 = vmatpush1.xpose.msra.mxu0 0.0
    %226 = vmatprep.subr.mxu0 0.0
    %227 = vmatpush1.xpose.msra.mxu0 0.0
    %228 = vmatprep.subr.mxu0 0.0
    %229 = vmatpush1.xpose.msra.mxu0 %v196
    %230 = vmatprep.subr.mxu0 0.0
    %231 = vmatpush2.xpose.msra.mxu0 0.0
    %232 = vmatprep.subr.mxu0 0.0
    %233 = vmatpush2.xpose.msra.mxu0 0.0
    %234 = vmatprep.subr.mxu0 0.0
    %235 = vmatpush2.xpose.msra.mxu0 0.0
    %236 = vmatprep.subr.mxu0 0.0
    %237 = vmatpush2.xpose.msra.mxu0 0.0
    %238 = vmatprep.subr.mxu0 0.0
    %239 = vmatpush2.xpose.msra.mxu0 0.0
    %240 = vmatprep.subr.mxu0 0.0
    %241 = vmatpush2.xpose.msra.mxu0 0.0
    %242 = vmatprep.subr.mxu0 0.0
    %243 = vmatpush2.xpose.msra.mxu0 0.0
    %244 = vmatprep.subr.mxu0 0.0
    %245 = vmatpush2.xpose.msra.mxu0 0.0
    %246 = vmatprep.subr.mxu0 0.0
    %247 = vmatpush2.xpose.msra.mxu0 0.0
    %248 = vmatprep.subr.mxu0 0.0
    %249 = vmatpush2.xpose.msra.mxu0 0.0
    %250 = vmatprep.subr.mxu0 0.0
    %251 = vmatpush2.xpose.msra.mxu0 0.0
    %252 = vmatprep.subr.mxu0 0.0
    %253 = vmatpush2.xpose.msra.mxu0 0.0
    %254 = vmatprep.subr.mxu0 0.0
    %255 = vmatpush2.xpose.msra.mxu0 0.0
    %256 = vmatprep.subr.mxu0 0.0
    %257 = vmatpush2.xpose.msra.mxu0 0.0
    %258 = vmatprep.subr.mxu0 0.0
    %259 = vmatpush2.xpose.msra.mxu0 0.0
    %260 = vmatprep.subr.mxu0 0.0
    %261 = vmatpush2.xpose.msra.mxu0 0.0
    %262 = vmatprep.mubr.f32.mxu0 0.0
    %263 = vmatmul.mubr.f32.gmra.mxu0 %v194
    %v264 = vpop.f32.mrf.mxu0
    %v265 = vadd.f32 %v188, %v264
    %v266 = vpop.f32.mrf.mxu0
    %267 = vdwg.mxu0
    %269 = vrot.lane.b32.xlu0 %v105, 112
    %v270 = vpop.permute.xlu0 %269
    %v271 = vsel %vm116, %v105, 0
    %v273 = vsel %vm116, %v270, 0
    %275 = vmatprep.subr.mxu0 0.0
    %276 = vmatpush1.xpose.msra.mxu0 0.0
    %277 = vmatprep.subr.mxu0 0.0
    %278 = vmatpush1.xpose.msra.mxu0 0.0
    %279 = vmatprep.subr.mxu0 0.0
    %280 = vmatpush1.xpose.msra.mxu0 0.0
    %281 = vmatprep.subr.mxu0 0.0
    %282 = vmatpush1.xpose.msra.mxu0 0.0
    %283 = vmatprep.subr.mxu0 0.0
    %284 = vmatpush1.xpose.msra.mxu0 0.0
    %285 = vmatprep.subr.mxu0 0.0
    %286 = vmatpush1.xpose.msra.mxu0 0.0
    %287 = vmatprep.subr.mxu0 0.0
    %288 = vmatpush1.xpose.msra.mxu0 0.0
    %289 = vmatprep.subr.mxu0 0.0
    %290 = vmatpush1.xpose.msra.mxu0 0.0
    %291 = vmatprep.subr.mxu0 0.0
    %292 = vmatpush1.xpose.msra.mxu0 0.0
    %293 = vmatprep.subr.mxu0 0.0
    %294 = vmatpush1.xpose.msra.mxu0 0.0
    %295 = vmatprep.subr.mxu0 0.0
    %296 = vmatpush1.xpose.msra.mxu0 0.0
    %297 = vmatprep.subr.mxu0 0.0
    %298 = vmatpush1.xpose.msra.mxu0 0.0
    %299 = vmatprep.subr.mxu0 0.0
    %300 = vmatpush1.xpose.msra.mxu0 0.0
    %301 = vmatprep.subr.mxu0 0.0
    %302 = vmatpush1.xpose.msra.mxu0 0.0
    %303 = vmatprep.subr.mxu0 0.0
    %304 = vmatpush1.xpose.msra.mxu0 0.0
    %305 = vmatprep.subr.mxu0 0.0
    %306 = vmatpush1.xpose.msra.mxu0 %v273
    %307 = vmatprep.subr.mxu0 0.0
    %308 = vmatpush2.xpose.msra.mxu0 0.0
    %309 = vmatprep.subr.mxu0 0.0
    %310 = vmatpush2.xpose.msra.mxu0 0.0
    %311 = vmatprep.subr.mxu0 0.0
    %312 = vmatpush2.xpose.msra.mxu0 0.0
    %313 = vmatprep.subr.mxu0 0.0
    %314 = vmatpush2.xpose.msra.mxu0 0.0
    %315 = vmatprep.subr.mxu0 0.0
    %316 = vmatpush2.xpose.msra.mxu0 0.0
    %317 = vmatprep.subr.mxu0 0.0
    %318 = vmatpush2.xpose.msra.mxu0 0.0
    %319 = vmatprep.subr.mxu0 0.0
    %320 = vmatpush2.xpose.msra.mxu0 0.0
    %321 = vmatprep.subr.mxu0 0.0
    %322 = vmatpush2.xpose.msra.mxu0 0.0
    %323 = vmatprep.subr.mxu0 0.0
    %324 = vmatpush2.xpose.msra.mxu0 0.0
    %325 = vmatprep.subr.mxu0 0.0
    %326 = vmatpush2.xpose.msra.mxu0 0.0
    %327 = vmatprep.subr.mxu0 0.0
    %328 = vmatpush2.xpose.msra.mxu0 0.0
    %329 = vmatprep.subr.mxu0 0.0
    %330 = vmatpush2.xpose.msra.mxu0 0.0
    %331 = vmatprep.subr.mxu0 0.0
    %332 = vmatpush2.xpose.msra.mxu0 0.0
    %333 = vmatprep.subr.mxu0 0.0
    %334 = vmatpush2.xpose.msra.mxu0 0.0
    %335 = vmatprep.subr.mxu0 0.0
    %336 = vmatpush2.xpose.msra.mxu0 0.0
    %337 = vmatprep.subr.mxu0 0.0
    %338 = vmatpush2.xpose.msra.mxu0 0.0
    %339 = vmatprep.mubr.f32.mxu0 0.0
    %340 = vmatmul.mubr.f32.gmra.mxu0 %v271
    %v341 = vpop.f32.mrf.mxu0
    %v342 = vadd.f32 %v188, %v341
    %v343 = vpop.f32.mrf.mxu0
    %344 = vdwg.mxu0
    %vm345 = vcmask 64512
    %v346 = vsel %vm345, %v265, -inf
    %347 = vmax.xlane.f32.xlu0 %v346
    %v348 = vpop.xlane.xlu0 %347
    %v349 = vsel %vm345, %v342, -inf
    %350 = vmax.xlane.f32.xlu0 %v349
    %v351 = vpop.xlane.xlu0 %350
    %v352 = vsub.f32 %v265, %v348
    %v353 = vsub.f32 %v342, %v351
    %v354 = vmul.f32 %v352, 1.442695
    %v355 = vpow.pop %v354
    %v356 = vmul.f32 %v353, 1.442695
    %v357 = vpow.pop %v356
    %v358 = vsel %vm345, %v355, 0.0
    %359 = vadd.xlane.f32.xlu0 %v358
    %v360 = vpop.xlane.xlu0 %359
    %v361 = vsel %vm345, %v357, 0.0
    %362 = vadd.xlane.f32.xlu0 %v361
    %v363 = vpop.xlane.xlu0 %362
    %v364 = vrcp.pop %v360
    %v365 = vmul.f32 1.0, %v364
    %v366 = vrcp.pop %v363
    %v367 = vmul.f32 1.0, %v366
    %v368 = vmul.f32 %v355, %v365
    %v369 = vmul.f32 %v357, %v367
    %370 = vrot.lane.b32.xlu0 %v100, 96
    %v371 = vpop.permute.xlu0 %370
    %v374 = vsel %vm345, %v368, 0
    %376 = vmatprep.subr.mxu0 0.0
    %377 = vmatpush1.msra.mxu0 0.0
    %378 = vmatprep.subr.mxu0 0.0
    %379 = vmatpush1.msra.mxu0 0.0
    %380 = vmatprep.subr.mxu0 0.0
    %381 = vmatpush1.msra.mxu0 0.0
    %382 = vmatprep.subr.mxu0 0.0
    %383 = vmatpush1.msra.mxu0 0.0
    %384 = vmatprep.subr.mxu0 0.0
    %385 = vmatpush1.msra.mxu0 0.0
    %386 = vmatprep.subr.mxu0 0.0
    %387 = vmatpush1.msra.mxu0 0.0
    %388 = vmatprep.subr.mxu0 0.0
    %389 = vmatpush1.msra.mxu0 0.0
    %390 = vmatprep.subr.mxu0 0.0
    %391 = vmatpush1.msra.mxu0 0.0
    %392 = vmatprep.subr.mxu0 0.0
    %393 = vmatpush1.msra.mxu0 0.0
    %394 = vmatprep.subr.mxu0 0.0
    %395 = vmatpush1.msra.mxu0 0.0
    %396 = vmatprep.subr.mxu0 0.0
    %397 = vmatpush1.msra.mxu0 0.0
    %398 = vmatprep.subr.mxu0 0.0
    %399 = vmatpush1.msra.mxu0 0.0
    %400 = vmatprep.subr.mxu0 0.0
    %401 = vmatpush1.msra.mxu0 0.0
    %402 = vmatprep.subr.mxu0 0.0
    %403 = vmatpush1.msra.mxu0 0.0
    %404 = vmatprep.subr.mxu0 0.0
    %405 = vmatpush1.msra.mxu0 0.0
    %406 = vmatprep.subr.mxu0 0.0
    %407 = vmatpush1.msra.mxu0 %v371
    %408 = vmatprep.subr.mxu0 0.0
    %409 = vmatpush2.msra.mxu0 0.0
    %410 = vmatprep.subr.mxu0 0.0
    %411 = vmatpush2.msra.mxu0 0.0
    %412 = vmatprep.subr.mxu0 0.0
    %413 = vmatpush2.msra.mxu0 0.0
    %414 = vmatprep.subr.mxu0 0.0
    %415 = vmatpush2.msra.mxu0 0.0
    %416 = vmatprep.subr.mxu0 0.0
    %417 = vmatpush2.msra.mxu0 0.0
    %418 = vmatprep.subr.mxu0 0.0
    %419 = vmatpush2.msra.mxu0 0.0
    %420 = vmatprep.subr.mxu0 0.0
    %421 = vmatpush2.msra.mxu0 0.0
    %422 = vmatprep.subr.mxu0 0.0
    %423 = vmatpush2.msra.mxu0 0.0
    %424 = vmatprep.subr.mxu0 0.0
    %425 = vmatpush2.msra.mxu0 0.0
    %426 = vmatprep.subr.mxu0 0.0
    %427 = vmatpush2.msra.mxu0 0.0
    %428 = vmatprep.subr.mxu0 0.0
    %429 = vmatpush2.msra.mxu0 0.0
    %430 = vmatprep.subr.mxu0 0.0
    %431 = vmatpush2.msra.mxu0 0.0
    %432 = vmatprep.subr.mxu0 0.0
    %433 = vmatpush2.msra.mxu0 0.0
    %434 = vmatprep.subr.mxu0 0.0
    %435 = vmatpush2.msra.mxu0 0.0
    %436 = vmatprep.subr.mxu0 0.0
    %437 = vmatpush2.msra.mxu0 0.0
    %438 = vmatprep.subr.mxu0 0.0
    %439 = vmatpush2.msra.mxu0 0.0
    %440 = vmatprep.mubr.f32.mxu0 0.0
    %441 = vmatmul.mubr.f32.gmra.mxu0 %v374
    %v442 = vpop.f32.mrf.mxu0
    %v443 = vadd.f32 0.0, %v442
    %v444 = vpop.f32.mrf.mxu0
    %445 = vdwg.mxu0
    %446 = vrot.lane.b32.xlu0 %v105, 96
    %v447 = vpop.permute.xlu0 %446
    %v450 = vsel %vm345, %v369, 0
    %452 = vmatprep.subr.mxu0 0.0
    %453 = vmatpush1.msra.mxu0 0.0
    %454 = vmatprep.subr.mxu0 0.0
    %455 = vmatpush1.msra.mxu0 0.0
    %456 = vmatprep.subr.mxu0 0.0
    %457 = vmatpush1.msra.mxu0 0.0
    %458 = vmatprep.subr.mxu0 0.0
    %459 = vmatpush1.msra.mxu0 0.0
    %460 = vmatprep.subr.mxu0 0.0
    %461 = vmatpush1.msra.mxu0 0.0
    %462 = vmatprep.subr.mxu0 0.0
    %463 = vmatpush1.msra.mxu0 0.0
    %464 = vmatprep.subr.mxu0 0.0
    %465 = vmatpush1.msra.mxu0 0.0
    %466 = vmatprep.subr.mxu0 0.0
    %467 = vmatpush1.msra.mxu0 0.0
    %468 = vmatprep.subr.mxu0 0.0
    %469 = vmatpush1.msra.mxu0 0.0
    %470 = vmatprep.subr.mxu0 0.0
    %471 = vmatpush1.msra.mxu0 0.0
    %472 = vmatprep.subr.mxu0 0.0
    %473 = vmatpush1.msra.mxu0 0.0
    %474 = vmatprep.subr.mxu0 0.0
    %475 = vmatpush1.msra.mxu0 0.0
    %476 = vmatprep.subr.mxu0 0.0
    %477 = vmatpush1.msra.mxu0 0.0
    %478 = vmatprep.subr.mxu0 0.0
    %479 = vmatpush1.msra.mxu0 0.0
    %480 = vmatprep.subr.mxu0 0.0
    %481 = vmatpush1.msra.mxu0 0.0
    %482 = vmatprep.subr.mxu0 0.0
    %483 = vmatpush1.msra.mxu0 %v447
    %484 = vmatprep.subr.mxu0 0.0
    %485 = vmatpush2.msra.mxu0 0.0
    %486 = vmatprep.subr.mxu0 0.0
    %487 = vmatpush2.msra.mxu0 0.0
    %488 = vmatprep.subr.mxu0 0.0
    %489 = vmatpush2.msra.mxu0 0.0
    %490 = vmatprep.subr.mxu0 0.0
    %491 = vmatpush2.msra.mxu0 0.0
    %492 = vmatprep.subr.mxu0 0.0
    %493 = vmatpush2.msra.mxu0 0.0
    %494 = vmatprep.subr.mxu0 0.0
    %495 = vmatpush2.msra.mxu0 0.0
    %496 = vmatprep.subr.mxu0 0.0
    %497 = vmatpush2.msra.mxu0 0.0
    %498 = vmatprep.subr.mxu0 0.0
    %499 = vmatpush2.msra.mxu0 0.0
    %500 = vmatprep.subr.mxu0 0.0
    %501 = vmatpush2.msra.mxu0 0.0
    %502 = vmatprep.subr.mxu0 0.0
    %503 = vmatpush2.msra.mxu0 0.0
    %504 = vmatprep.subr.mxu0 0.0
    %505 = vmatpush2.msra.mxu0 0.0
    %506 = vmatprep.subr.mxu0 0.0
    %507 = vmatpush2.msra.mxu0 0.0
    %508 = vmatprep.subr.mxu0 0.0
    %509 = vmatpush2.msra.mxu0 0.0
    %510 = vmatprep.subr.mxu0 0.0
    %511 = vmatpush2.msra.mxu0 0.0
    %512 = vmatprep.subr.mxu0 0.0
    %513 = vmatpush2.msra.mxu0 0.0
    %514 = vmatprep.subr.mxu0 0.0
    %515 = vmatpush2.msra.mxu0 0.0
    %516 = vmatprep.mubr.f32.mxu0 0.0
    %517 = vmatmul.mubr.f32.gmra.mxu0 %v450
    %v518 = vpop.f32.mrf.mxu0
    %v519 = vadd.f32 0.0, %v518
    %v520 = vpop.f32.mrf.mxu0
    %521 = vdwg.mxu0
    %522 = vst.msk [vmem:[#allocation2] sm:$0xff] %vm116, %v443
    %523 = vst.msk [vmem:[#allocation2 + $0x8] sm:$0xff] %vm116, %v519
    %524 = vst.msk [vmem:[%s3] sm:$0xff] %vm345, %v368
    %525 = vst.msk [vmem:[%s3 + $0x8] sm:$0xff] %vm345, %v369
    // Predicated region
    $region10: #{tpu_custom_call.1} parent=1 // pred_check
      _
    $region11: #{tpu_custom_call.1} parent=1 // pred_check_branch
      %527 = sbr.rel (0) target = $region13
    $region12: #{tpu_custom_call.1} parent=1 // pred_region
      %s529 = ssub.s32 256, 256
      %530 = vsyncadd [#allocation3], %s529
      %s531 = sshll.u32 [#allocation2], 4
      %s532 = int_to_ptr.vmem [resolvable:$true] %s531
      %537 = dma.vmem_to_hbm [thread:$0]  %s532, 256, %s2, [#allocation3], 128, 128, 8
    $region13: #{tpu_custom_call.1} parent=1 // pred_fallthru
      _
    // Predicated region
    $region14: #{tpu_custom_call.1} parent=1 // pred_check
      _
    $region15: #{tpu_custom_call.1} parent=1 // pred_check_branch
      %539 = sbr.rel (0) target = $region17
    $region16: #{tpu_custom_call.1} parent=1 // pred_region
      _
    $region17: #{tpu_custom_call.1} parent=1 // pred_fallthru
      _
    // Predicated region
    $region18: #{tpu_custom_call.1} parent=1 // pred_check
      _
    $region19: #{tpu_custom_call.1} parent=1 // pred_check_branch
      %541 = sbr.rel (0) target = $region21
    $region20: #{tpu_custom_call.1} parent=1 // pred_region
      %542 = dma.done [#allocation3], 256
    $region21: #{tpu_custom_call.1} parent=1 // pred_fallthru
      _
    // Predicated region
    $region22: #{tpu_custom_call.1} parent=1 // pred_check
      _
    $region23: #{tpu_custom_call.1} parent=1 // pred_check_branch
      %544 = sbr.rel (0) target = $region25
    $region24: #{tpu_custom_call.1} parent=1 // pred_region
      _
    $region25: #{tpu_custom_call.1} parent=1 // pred_fallthru
      _
    %545 = vsyncpa [#allocation3], 1

</llo_original>
